<compile_context>
chip_gen: v7x
topology: tpu7x:2x2x1
jax: 0.10.0
libtpu: 0.0.40
codegen_flags: <defaults>
</compile_context>

<pallas_src>
import functools

import jax
import jax.numpy as jnp
from jax.experimental import pallas as pl
from jax.experimental.pallas import tpu as pltpu

TIME_WINDOW = 4
THRESH = 0.5
DECAY = 0.25

LANE = 128


# --------------------------- Pallas kernel -----------------------------------

def _mem_update_kernel(x_ref, o_ref, *, t, thresh, decay):
    """Spiking membrane update over the (in-block) time axis.

    x_ref: (T, BLK_ROWS, 128) input dtype (f32 / bf16 / ...)
    o_ref: (T, BLK_ROWS, 128) spikes in output dtype (0/1)

      mem_0   = x_0
      mem_i   = mem_{i-1} * decay * (1 - spike_{i-1}) + x_i   (i >= 1)
      spike_i = (mem_i > thresh)
    """
    mem = x_ref[0].astype(jnp.float32)
    cmp = mem > thresh
    o_ref[0] = cmp.astype(o_ref.dtype)
    for i in range(1, t):                     # T is tiny (4) -> static unroll
        # fused gate: mem * decay * (1 - spike) == mem * where(spike, 0, decay)
        mem = mem * jnp.where(cmp, 0.0, decay) + x_ref[i].astype(jnp.float32)
        cmp = mem > thresh
        o_ref[i] = cmp.astype(o_ref.dtype)


# --------------------------- wrapper ------------------------------------------

def _round_up(v, m):
    return ((v + m - 1) // m) * m


def _sublane_multiple(dtype):
    # sublane tile: 8 for 4-byte, 16 for 2-byte, 32 for 1-byte dtypes
    return max(8, 32 // jnp.dtype(dtype).itemsize)


def mem_update(x, *, thresh=THRESH, decay=DECAY, block_rows=2048):
    """x: (T, ...) float array. Returns spikes (0/1) with x's shape & dtype.

    Matches `mem_update.forward` of the PyTorch module (forward only).
    """
    t = x.shape[0]
    orig_shape = x.shape

    in_dtype = x.dtype
    if not jnp.issubdtype(in_dtype, jnp.floating):
        x = x.astype(jnp.float32)
        in_dtype = jnp.dtype(jnp.float32)
    out_dtype = in_dtype                     # 0/1 spikes are exact in bf16 too

    n = 1
    for d in orig_shape[1:]:
        n *= d
    xf = x.reshape(t, n)

    # lane-dense layout: last axis = 128. Pad only if needed, and only to the
    # next 128 multiple (not to a whole number of blocks).
    n_pad = _round_up(n, LANE)
    if n_pad != n:
        xf = jnp.pad(xf, ((0, 0), (0, n_pad - n)))
    rows = n_pad // LANE
    x3 = xf.reshape(t, rows, LANE)

    mult = max(_sublane_multiple(in_dtype), _sublane_multiple(out_dtype))

    # cap the block so the double-buffered in+out footprint stays well under
    # v7x's 64 MiB VMEM (~40 MiB budget for the pipeline buffers).
    bytes_per_row = t * LANE * (jnp.dtype(in_dtype).itemsize
                                + jnp.dtype(out_dtype).itemsize)
    vmem_cap_rows = max(mult, ((40 << 20) // (2 * bytes_per_row)) // mult * mult)

    blk = min(block_rows, rows, vmem_cap_rows)
    blk = _round_up(max(blk, 1), mult)
    # ensure >= 2 grid steps when possible so both v7x TensorCores get work
    if pl.cdiv(rows, blk) < 2 and rows > mult:
        blk = _round_up(pl.cdiv(rows, 2), mult)
    grid_m = pl.cdiv(rows, blk)

    # vmem limit derived from the actual double-buffered block footprint
    vmem_needed = 2 * blk * bytes_per_row
    vmem_limit = int(min(max(vmem_needed + (4 << 20), 16 << 20), 48 << 20))

    out = pl.pallas_call(
        functools.partial(_mem_update_kernel, t=t, thresh=thresh, decay=decay),
        out_shape=jax.ShapeDtypeStruct((t, rows, LANE), out_dtype),
        grid=(grid_m,),
        in_specs=[pl.BlockSpec((t, blk, LANE), lambda i: (0, i, 0))],
        out_specs=pl.BlockSpec((t, blk, LANE), lambda i: (0, i, 0)),
        compiler_params=pltpu.CompilerParams(
            dimension_semantics=("parallel",),
            vmem_limit_bytes=vmem_limit,
        ),
    )(x3)

    out = out.reshape(t, n_pad)
    if n_pad != n:
        out = out[:, :n]
    return out.reshape(orig_shape)


# --------------------------- pure-JAX reference --------------------------------

def mem_update_ref(x, thresh=THRESH, decay=DECAY):
    t = x.shape[0]
    xf = x.astype(jnp.float32)
    outs = []
    mem = xf[0]
    spike = (mem > thresh).astype(jnp.float32)
    outs.append(spike)
    for i in range(1, t):
        mem = mem * decay * (1.0 - spike) + xf[i]
        spike = (mem > thresh).astype(jnp.float32)
        outs.append(spike)
    return jnp.stack(outs, axis=0)


def _check(x, **kw):
    out = jax.block_until_ready(mem_update(x, **kw))
    ref = mem_update_ref(x)
    assert out.shape == x.shape, (out.shape, x.shape)
    # spikes are 0/1 -> mean abs diff == fraction of mismatched spikes
    err = float(jnp.mean(jnp.abs(out.astype(jnp.float32) - ref)))
    assert err < 1e-3, f"spike mismatch fraction too large: {err}"


# --------------------------- main ----------------------------------------------

if __name__ == "__main__":
    # x: (time_window, batch, channels, H, W) as consumed by the PyTorch module.
    T, B, C, H, W = TIME_WINDOW, 2, 4, 16, 16
    key = jax.random.PRNGKey(0)

    # f32, nicely divisible (no pad, grid split into >=2 steps)
    x = jax.random.normal(key, (T, B, C, H, W), jnp.float32)
    _check(x)

    # odd, non-128-divisible shape: exercises the minimal 128-pad path
    x2 = jax.random.normal(jax.random.PRNGKey(1), (T, 3, 5, 7, 9), jnp.float32)
    _check(x2)

    # bf16 input: native-dtype blocks in and out (16-sublane tiles)
    x3 = jax.random.normal(jax.random.PRNGKey(2), (T, 2, 8, 16, 16),
                           jnp.bfloat16)
    _check(x3)

    print("KERNEL_OK")
</pallas_src>

<mosaic_0001>
module attributes {stable_mosaic.version = 11 : i64} {
  func.func @_mem_update_kernel(%arg0: i32, %arg1: memref<4x8x128xf32, #tpu.memory_space<vmem>>, %arg2: memref<4x8x128xf32, #tpu.memory_space<vmem>>) attributes {dimension_semantics = [#tpu.dimension_semantics<parallel>], iteration_bounds = array<i64: 2>, scalar_prefetch = 0 : i64, scratch_operands = 0 : i64, tpu.core_type = #tpu.core_type<tc>, window_params = [{transform_indices = @transform_0, window_bounds = array<i64: 4, 8, 128>}, {transform_indices = @transform_1, window_bounds = array<i64: 4, 8, 128>}]} {
    %c0 = arith.constant 0 : index
    %c0_0 = arith.constant 0 : index
    %c0_1 = arith.constant 0 : index
    %0 = vector.load %arg1[%c0, %c0_0, %c0_1] : memref<4x8x128xf32, #tpu.memory_space<vmem>>, vector<1x8x128xf32>
    %1 = vector.shape_cast %0 : vector<1x8x128xf32> to vector<8x128xf32>
    %cst = arith.constant 5.000000e-01 : f32
    %2 = vector.broadcast %cst : f32 to vector<8x128xf32>
    %3 = arith.cmpf ogt, %1, %2 : vector<8x128xf32>
    %4 = arith.extui %3 : vector<8x128xi1> to vector<8x128xi32>
    %5 = arith.sitofp %4 : vector<8x128xi32> to vector<8x128xf32>
    %c0_2 = arith.constant 0 : index
    %c0_3 = arith.constant 0 : index
    %c0_4 = arith.constant 0 : index
    %6 = vector.load %arg2[%c0_2, %c0_3, %c0_4] : memref<4x8x128xf32, #tpu.memory_space<vmem>>, vector<1x8x128xf32>
    %7 = vector.shape_cast %6 : vector<1x8x128xf32> to vector<8x128xf32>
    %8 = vector.shape_cast %5 : vector<8x128xf32> to vector<1x8x128xf32>
    tpu.vector_store %arg2[%c0_2, %c0_3, %c0_4], %8 {strides = array<i32>} : memref<4x8x128xf32, #tpu.memory_space<vmem>>, vector<1x8x128xf32>,
    %cst_5 = arith.constant 0.000000e+00 : f32
    %cst_6 = arith.constant 2.500000e-01 : f32
    %9 = vector.broadcast %cst_5 : f32 to vector<8x128xf32>
    %10 = vector.broadcast %cst_6 : f32 to vector<8x128xf32>
    %11 = arith.select %3, %9, %10 : vector<8x128xi1>, vector<8x128xf32>
    %12 = arith.mulf %1, %11 : vector<8x128xf32>
    %c1 = arith.constant 1 : index
    %c0_7 = arith.constant 0 : index
    %c0_8 = arith.constant 0 : index
    %13 = vector.load %arg1[%c1, %c0_7, %c0_8] : memref<4x8x128xf32, #tpu.memory_space<vmem>>, vector<1x8x128xf32>
    %14 = vector.shape_cast %13 : vector<1x8x128xf32> to vector<8x128xf32>
    %15 = arith.addf %12, %14 : vector<8x128xf32>
    %cst_9 = arith.constant 5.000000e-01 : f32
    %16 = vector.broadcast %cst_9 : f32 to vector<8x128xf32>
    %17 = arith.cmpf ogt, %15, %16 : vector<8x128xf32>
    %18 = arith.extui %17 : vector<8x128xi1> to vector<8x128xi32>
    %19 = arith.sitofp %18 : vector<8x128xi32> to vector<8x128xf32>
    %c1_10 = arith.constant 1 : index
    %c0_11 = arith.constant 0 : index
    %c0_12 = arith.constant 0 : index
    %20 = vector.load %arg2[%c1_10, %c0_11, %c0_12] : memref<4x8x128xf32, #tpu.memory_space<vmem>>, vector<1x8x128xf32>
    %21 = vector.shape_cast %20 : vector<1x8x128xf32> to vector<8x128xf32>
    %22 = vector.shape_cast %19 : vector<8x128xf32> to vector<1x8x128xf32>
    tpu.vector_store %arg2[%c1_10, %c0_11, %c0_12], %22 {strides = array<i32>} : memref<4x8x128xf32, #tpu.memory_space<vmem>>, vector<1x8x128xf32>,
    %cst_13 = arith.constant 0.000000e+00 : f32
    %cst_14 = arith.constant 2.500000e-01 : f32
    %23 = vector.broadcast %cst_13 : f32 to vector<8x128xf32>
    %24 = vector.broadcast %cst_14 : f32 to vector<8x128xf32>
    %25 = arith.select %17, %23, %24 : vector<8x128xi1>, vector<8x128xf32>
    %26 = arith.mulf %15, %25 : vector<8x128xf32>
    %c2 = arith.constant 2 : index
    %c0_15 = arith.constant 0 : index
    %c0_16 = arith.constant 0 : index
    %27 = vector.load %arg1[%c2, %c0_15, %c0_16] : memref<4x8x128xf32, #tpu.memory_space<vmem>>, vector<1x8x128xf32>
    %28 = vector.shape_cast %27 : vector<1x8x128xf32> to vector<8x128xf32>
    %29 = arith.addf %26, %28 : vector<8x128xf32>
    %cst_17 = arith.constant 5.000000e-01 : f32
    %30 = vector.broadcast %cst_17 : f32 to vector<8x128xf32>
    %31 = arith.cmpf ogt, %29, %30 : vector<8x128xf32>
    %32 = arith.extui %31 : vector<8x128xi1> to vector<8x128xi32>
    %33 = arith.sitofp %32 : vector<8x128xi32> to vector<8x128xf32>
    %c2_18 = arith.constant 2 : index
    %c0_19 = arith.constant 0 : index
    %c0_20 = arith.constant 0 : index
    %34 = vector.load %arg2[%c2_18, %c0_19, %c0_20] : memref<4x8x128xf32, #tpu.memory_space<vmem>>, vector<1x8x128xf32>
    %35 = vector.shape_cast %34 : vector<1x8x128xf32> to vector<8x128xf32>
    %36 = vector.shape_cast %33 : vector<8x128xf32> to vector<1x8x128xf32>
    tpu.vector_store %arg2[%c2_18, %c0_19, %c0_20], %36 {strides = array<i32>} : memref<4x8x128xf32, #tpu.memory_space<vmem>>, vector<1x8x128xf32>,
    %cst_21 = arith.constant 0.000000e+00 : f32
    %cst_22 = arith.constant 2.500000e-01 : f32
    %37 = vector.broadcast %cst_21 : f32 to vector<8x128xf32>
    %38 = vector.broadcast %cst_22 : f32 to vector<8x128xf32>
    %39 = arith.select %31, %37, %38 : vector<8x128xi1>, vector<8x128xf32>
    %40 = arith.mulf %29, %39 : vector<8x128xf32>
    %c3 = arith.constant 3 : index
    %c0_23 = arith.constant 0 : index
    %c0_24 = arith.constant 0 : index
    %41 = vector.load %arg1[%c3, %c0_23, %c0_24] : memref<4x8x128xf32, #tpu.memory_space<vmem>>, vector<1x8x128xf32>
    %42 = vector.shape_cast %41 : vector<1x8x128xf32> to vector<8x128xf32>
    %43 = arith.addf %40, %42 : vector<8x128xf32>
    %cst_25 = arith.constant 5.000000e-01 : f32
    %44 = vector.broadcast %cst_25 : f32 to vector<8x128xf32>
    %45 = arith.cmpf ogt, %43, %44 : vector<8x128xf32>
    %46 = arith.extui %45 : vector<8x128xi1> to vector<8x128xi32>
    %47 = arith.sitofp %46 : vector<8x128xi32> to vector<8x128xf32>
    %c3_26 = arith.constant 3 : index
    %c0_27 = arith.constant 0 : index
    %c0_28 = arith.constant 0 : index
    %48 = vector.load %arg2[%c3_26, %c0_27, %c0_28] : memref<4x8x128xf32, #tpu.memory_space<vmem>>, vector<1x8x128xf32>
    %49 = vector.shape_cast %48 : vector<1x8x128xf32> to vector<8x128xf32>
    %50 = vector.shape_cast %47 : vector<8x128xf32> to vector<1x8x128xf32>
    tpu.vector_store %arg2[%c3_26, %c0_27, %c0_28], %50 {strides = array<i32>} : memref<4x8x128xf32, #tpu.memory_space<vmem>>, vector<1x8x128xf32>,
    return
  }
  func.func @transform_0(%arg0: i32) -> (i32, i32, i32) {
    %c0_i32 = arith.constant 0 : i32
    %c0_i32_0 = arith.constant 0 : i32
    %c0_i32_1 = arith.constant 0 : i32
    return %c0_i32, %arg0, %c0_i32_0 : i32, i32, i32
  }
  func.func @transform_1(%arg0: i32) -> (i32, i32, i32) {
    %c0_i32 = arith.constant 0 : i32
    %c0_i32_0 = arith.constant 0 : i32
    %c0_i32_1 = arith.constant 0 : i32
    return %c0_i32, %arg0, %c0_i32_0 : i32, i32, i32
  }
}

</mosaic_0001>

<llo_original>
// kernel: tpu_custom_call.1
$region0: #{tpu_custom_call.1}
  #allocation0 [shape = 'u32[]', space=smem, size = 0x4, offset = 0x4, fixed_abs, tag = 'smem constant byte address 0x4 - core index']
  #allocation1 [shape = 'u32[144,128]{1,0:T(1,128)}', space=vmem, size = 0x12000, scoped, tag = 'internal scratch']
  %s0 = inlined_call_operand.hbm [shape: f32[4,16,128], index: 0, kind: input, shape index: {}]
  %s1 = inlined_call_operand.hbm [shape: f32[4,16,128], index: 1, kind: output, shape index: {}]
  %s2 = sld [smem:[#allocation0]]
  $region41: #{tpu_custom_call.1} parent=0
    _
  %s4 = ssub.s32 1, %s2
  %s5 = scalar_select 0, %s4, %s2
  $region1: #{tpu_custom_call.1} parent=0
    #allocation2 [shape = 'u8[32768]{0}', space=vmem, size = 0x8000, scoped, tag = 'input window, operand 0']
    #allocation3 [shape = 's32[2]{0}', space=sflag, size = 0x8, scoped, tag = 'scoped memory for tpu_custom_call.1']
    #allocation4 [shape = 's32[2]{0}', space=sflag, size = 0x8, scoped, tag = 'scoped memory for tpu_custom_call.1']
    #allocation5 [shape = 'u8[32768]{0}', space=vmem, size = 0x8000, scoped, tag = 'output window, operand 0']
    %6 = vsyncpa [#allocation3], 0
    %s7 = scalar_lea.sflag [#allocation3], 1
    %8 = vsyncpa %s7, 0
    %9 = vsyncpa [#allocation4], 0
    %s10 = scalar_lea.sflag [#allocation4], 1
    %11 = vsyncpa %s10, 0
    loop: start=0, step=1, limit=4
    $region2: #{tpu_custom_call.1} parent=1 // loop_pre_header
      _
    $region3: #{tpu_custom_call.1} parent=1 // loop_header
      %s13 = sphi 0, %s17
      %p14 = scmp.ge.s32.totalorder %s13, 4
      %s23 = sphi 0, %s25
      %s26 = sphi 0, %s23
      %s27 = sphi 0, %s26
      %s43 = sphi 0, %s27
      %s49 = sphi 0, %s51
      %s52 = sphi 0, %s49
      %s53 = sphi 0, %s52
      %s69 = sphi 0, %s53
    $region4: #{tpu_custom_call.1} parent=1 // loop_header_branch
      %16 = sbr.rel (%p14) target = $region8
    $region5: #{tpu_custom_call.1} parent=1 // loop_body
      %s18 = ssub.s32 %s13, 1
      %s19 = ssub.s32 %s13, 2
      %s20 = sadd.s32 %s13, 1
      %s21 = ssub.s32 %s13, %s20
      %p22 = scmp.eq.s32.totalorder %s21, 0
      %s24 = sadd.s32 %s23, 1
      %s25 = scalar_select %p22, %s23, %s24
      %p28 = pneg %p22
      %p29 = scmp.eq.s32.totalorder %s13, 1
      %p30 = por %p28, %p29
      %p31 = scmp.ne.s32.totalorder %s23, %s26
      %p32 = scmp.eq.s32.totalorder %s13, 0
      %p33 = por %p31, %p32
      %p34 = scmp.ne.s32.totalorder %s23, %s26
      %p35 = scmp.eq.s32.totalorder %s18, 1
      %p36 = por %p34, %p35
      %p37 = scmp.ne.s32.totalorder %s26, %s27
      %p38 = scmp.eq.s32.totalorder %s18, 0
      %p39 = por %p37, %p38
      %p40 = scmp.ne.s32.totalorder %s26, %s27
      %p41 = scmp.eq.s32.totalorder %s19, 1
      %p42 = por %p40, %p41
      %p44 = scmp.ne.s32.totalorder %s27, %s43
      %p45 = scmp.eq.s32.totalorder %s19, 0
      %p46 = por %p44, %p45
      %s47 = ssub.s32 %s13, %s20
      %p48 = scmp.eq.s32.totalorder %s47, 0
      %s50 = sadd.s32 %s49, 1
      %s51 = scalar_select %p48, %s49, %s50
      %p54 = pneg %p48
      %p55 = scmp.eq.s32.totalorder %s13, 1
      %p56 = por %p54, %p55
      %p57 = scmp.ne.s32.totalorder %s49, %s52
      %p58 = scmp.eq.s32.totalorder %s13, 0
      %p59 = por %p57, %p58
      %p60 = scmp.ne.s32.totalorder %s49, %s52
      %p61 = scmp.eq.s32.totalorder %s18, 1
      %p62 = por %p60, %p61
      %p63 = scmp.ne.s32.totalorder %s52, %s53
      %p64 = scmp.eq.s32.totalorder %s18, 0
      %p65 = por %p63, %p64
      %p66 = scmp.ne.s32.totalorder %s52, %s53
      %p67 = scmp.eq.s32.totalorder %s19, 1
      %p68 = por %p66, %p67
      %p70 = scmp.ne.s32.totalorder %s53, %s69
      %p71 = scmp.eq.s32.totalorder %s19, 0
      %p72 = por %p70, %p71
      %p73 = scmp.le.s32.totalorder 1, %s13
      %p74 = scmp.lt.s32.totalorder %s13, 3
      %p75 = pnand %p73, %p74
      %p76 = pneg %p75
      // Predicated region
      $region9: #{tpu_custom_call.1} parent=5 // pred_check
        _
      $region10: #{tpu_custom_call.1} parent=5 // pred_check_branch
        %78 = sbr.rel (%p75) target = $region12
      $region11: #{tpu_custom_call.1} parent=5 // pred_region
        %s79 = ssub.s32 %s13, 1
      $region12: #{tpu_custom_call.1} parent=5 // pred_fallthru
        _
      %p80 = scmp.lt.s32.totalorder %s13, 2
      // Predicated region
      $region13: #{tpu_custom_call.1} parent=5 // pred_check
        %p81 = pneg %p80
      $region14: #{tpu_custom_call.1} parent=5 // pred_check_branch
        %83 = sbr.rel (%p81) target = $region16
      $region15: #{tpu_custom_call.1} parent=5 // pred_region
        // Predicated region
        $region17: #{tpu_custom_call.1} parent=15 // pred_check
          %p84 = pneg %p33
        $region18: #{tpu_custom_call.1} parent=15 // pred_check_branch
          %86 = sbr.rel (%p84) target = $region20
        $region19: #{tpu_custom_call.1} parent=15 // pred_region
          %s87 = sand.u32 %s23, 1
          %s88 = scalar_lea.sflag [#allocation3], %s87
          %s89 = sand.u32 %s23, 1
          %s90 = smul.addr %s89, 32
          %s91 = scalar_lea.vmem [#allocation2], %s90
          %s93 = ssub.s32 512, 512
          %94 = vsyncadd %s88, %s93
          %s95 = smul.addr %s13, 128
          %s96 = scalar_lea.hbm %s0, %s95
          %s97 = sshll.u32 %s91, 4
          %s98 = int_to_ptr.vmem [resolvable:$true] %s97
          %103 = dma.hbm_to_vmem [thread:$0]  %s96, 512, %s98, %s88, 256, 128, 8
        $region20: #{tpu_custom_call.1} parent=15 // pred_fallthru
          _
      $region16: #{tpu_custom_call.1} parent=5 // pred_fallthru
        _
      %p104 = scmp.le.s32.totalorder 1, %s13
      %p105 = scmp.lt.s32.totalorder %s13, 3
      %p106 = pnand %p104, %p105
      %p107 = pneg %p106
      // Predicated region
      $region21: #{tpu_custom_call.1} parent=5 // pred_check
        _
      $region22: #{tpu_custom_call.1} parent=5 // pred_check_branch
        %109 = sbr.rel (%p106) target = $region24
      $region23: #{tpu_custom_call.1} parent=5 // pred_region
        %s110 = ssub.s32 %s13, 1
        %s111 = sand.u32 %s26, 1
        %s112 = scalar_lea.sflag [#allocation3], %s111
        %s113 = sand.u32 %s26, 1
        %s114 = smul.addr %s113, 32
        %s115 = scalar_lea.vmem [#allocation2], %s114
        // Predicated region
        $region25: #{tpu_custom_call.1} parent=23 // pred_check
          %p116 = pneg %p39
        $region26: #{tpu_custom_call.1} parent=23 // pred_check_branch
          %118 = sbr.rel (%p116) target = $region28
        $region27: #{tpu_custom_call.1} parent=23 // pred_region
          %119 = dma.done %s112, 512
        $region28: #{tpu_custom_call.1} parent=23 // pred_fallthru
          _
        %s120 = sand.u32 %s26, 1
        %s121 = scalar_lea.sflag [#allocation3], %s120
        %s122 = sand.u32 %s26, 1
        %s123 = smul.addr %s122, 32
        %s124 = scalar_lea.vmem [#allocation2], %s123
        %p125 = pneg %p39
        %p126 = pneg %p36
        %p127 = pneg %p65
        %p128 = pneg %p62
        %s129 = sand.u32 %s52, 1
        %s130 = scalar_lea.sflag [#allocation4], %s129
        %s131 = sand.u32 %s52, 1
        %s132 = smul.addr %s131, 32
        %s133 = scalar_lea.vmem [#allocation5], %s132
        %v134 = vld [vmem:[%s115] sm:$0xff]
        %vm135 = vcmp.gt.f32.partialorder %v134, 0.5
        %v136 = vsel %vm135, 1, 0
        %v137 = vcvt.s32.f32 %v136
        %138 = vst [vmem:[%s133] sm:$0xff] %v137
        %v139 = vsel %vm135, 0.0, 0.25
        %v140 = vmul.f32 %v134, %v139
        %s141 = scalar_lea.vmem %s115, 8 [#allocation2]
        %v142 = vld [vmem:[%s141] sm:$0xff]
        %v143 = vadd.f32 %v140, %v142
        %vm144 = vcmp.gt.f32.partialorder %v143, 0.5
        %v145 = vsel %vm144, 1, 0
        %v146 = vcvt.s32.f32 %v145
        %s147 = scalar_lea.vmem %s133, 8 [#allocation5]
        %148 = vst [vmem:[%s147] sm:$0xff] %v146
        %v149 = vsel %vm144, 0.0, 0.25
        %v150 = vmul.f32 %v143, %v149
        %s151 = scalar_lea.vmem %s115, 16 [#allocation2]
        %v152 = vld [vmem:[%s151] sm:$0xff]
        %v153 = vadd.f32 %v150, %v152
        %vm154 = vcmp.gt.f32.partialorder %v153, 0.5
        %v155 = vsel %vm154, 1, 0
        %v156 = vcvt.s32.f32 %v155
        %s157 = scalar_lea.vmem %s133, 16 [#allocation5]
        %158 = vst [vmem:[%s157] sm:$0xff] %v156
        %v159 = vsel %vm154, 0.0, 0.25
        %v160 = vmul.f32 %v153, %v159
        %s161 = scalar_lea.vmem %s115, 24 [#allocation2]
        %v162 = vld [vmem:[%s161] sm:$0xff]
        %v163 = vadd.f32 %v160, %v162
        %vm164 = vcmp.gt.f32.partialorder %v163, 0.5
        %v165 = vsel %vm164, 1, 0
        %v166 = vcvt.s32.f32 %v165
        %s167 = scalar_lea.vmem %s133, 24 [#allocation5]
        %168 = vst [vmem:[%s167] sm:$0xff] %v166
        %s169 = sand.u32 %s52, 1
        %s170 = scalar_lea.sflag [#allocation4], %s169
        %s171 = sand.u32 %s52, 1
        %s172 = smul.addr %s171, 32
        %s173 = scalar_lea.vmem [#allocation5], %s172
        // Predicated region
        $region29: #{tpu_custom_call.1} parent=23 // pred_check
          %p174 = pneg %p62
        $region30: #{tpu_custom_call.1} parent=23 // pred_check_branch
          %176 = sbr.rel (%p174) target = $region32
        $region31: #{tpu_custom_call.1} parent=23 // pred_region
          %s178 = ssub.s32 512, 512
          %179 = vsyncadd %s170, %s178
          %s180 = smul.addr %s18, 128
          %s181 = scalar_lea.hbm %s1, %s180
          %s182 = sshll.u32 %s173, 4
          %s183 = int_to_ptr.vmem [resolvable:$true] %s182
          %188 = dma.vmem_to_hbm [thread:$0]  %s183, 512, %s181, %s170, 128, 256, 8
        $region32: #{tpu_custom_call.1} parent=23 // pred_fallthru
          _
      $region24: #{tpu_custom_call.1} parent=5 // pred_fallthru
        _
      %p189 = scmp.le.s32.totalorder 2, %s13
      // Predicated region
      $region33: #{tpu_custom_call.1} parent=5 // pred_check
        %p190 = pneg %p189
      $region34: #{tpu_custom_call.1} parent=5 // pred_check_branch
        %192 = sbr.rel (%p190) target = $region36
      $region35: #{tpu_custom_call.1} parent=5 // pred_region
        %s193 = ssub.s32 %s13, 2
        // Predicated region
        $region37: #{tpu_custom_call.1} parent=35 // pred_check
          %p194 = pneg %p68
        $region38: #{tpu_custom_call.1} parent=35 // pred_check_branch
          %196 = sbr.rel (%p194) target = $region40
        $region39: #{tpu_custom_call.1} parent=35 // pred_region
          %s197 = sand.u32 %s53, 1
          %s198 = scalar_lea.sflag [#allocation4], %s197
          %s199 = sand.u32 %s53, 1
          %s200 = smul.addr %s199, 32
          %s201 = scalar_lea.vmem [#allocation5], %s200
          %202 = dma.done %s198, 512
        $region40: #{tpu_custom_call.1} parent=35 // pred_fallthru
          _
      $region36: #{tpu_custom_call.1} parent=5 // pred_fallthru
        _
    $region6: #{tpu_custom_call.1} parent=1 // loop_footer
      %s17 = sadd.s32 1, %s13
    $region7: #{tpu_custom_call.1} parent=1 // loop_footer_branch
      %12 = sbr.rel target = $region3
    $region8: #{tpu_custom_call.1} parent=1 // loop_exit
      _
    %203 = vsyncpa [#allocation3], 1
    %s204 = scalar_lea.sflag [#allocation3], 1
    %205 = vsyncpa %s204, 1
    %206 = vsyncpa [#allocation4], 1
    %s207 = scalar_lea.sflag [#allocation4], 1
    %208 = vsyncpa %s207, 1

</llo_original>
